<compile_context>
chip_gen: v5e
topology: v5e:2x2
jax: 0.10.0
libtpu: 0.0.40
codegen_flags: <defaults>
</compile_context>

<pallas_src>
import functools

import jax
import jax.numpy as jnp
from jax.experimental import pallas as pl
from jax.experimental.pallas import tpu as pltpu

_VMEM_LIMIT = 64 * 1024 * 1024


# ----------------------------------------------------------------------------
# helpers
# ----------------------------------------------------------------------------
def _round_up(n, m):
    return ((n + m - 1) // m) * m


def _pick_tile(n, target):
    """Largest tile <= target that divides n and is a multiple of 8 (or n)."""
    if n <= target:
        return n
    t = min(target, n)
    t -= t % 8
    while t >= 8:
        if n % t == 0:
            return t
        t -= 8
    return n


# ----------------------------------------------------------------------------
# Pallas kernel: qkv projection (no bias) -> three bf16 outputs
# ----------------------------------------------------------------------------
def _qkv_kernel(x_ref, wq_ref, wk_ref, wv_ref, q_ref, k_ref, v_ref, *, compute_dtype):
    # x_ref: (1, TN, K) ; w*_ref: (K, inner) bf16 resident ; outputs (1, TN, inner) bf16
    x = x_ref[0].astype(compute_dtype)
    q_ref[0] = jnp.dot(x, wq_ref[...], preferred_element_type=jnp.float32).astype(q_ref.dtype)
    k_ref[0] = jnp.dot(x, wk_ref[...], preferred_element_type=jnp.float32).astype(k_ref.dtype)
    v_ref[0] = jnp.dot(x, wv_ref[...], preferred_element_type=jnp.float32).astype(v_ref.dtype)


def qkv_projection(x, wq, wk, wv, *, compute_dtype=jnp.bfloat16,
                   out_dtype=jnp.bfloat16, tile_n=512,
                   vmem_limit_bytes=_VMEM_LIMIT):
    """x: (B, N, K); wq/wk/wv: (K, inner) bf16 -> q, k, v each (B, N, inner) bf16."""
    B, N, K = x.shape
    M = wq.shape[1]
    tn = _pick_tile(N, tile_n)
    kernel = functools.partial(_qkv_kernel, compute_dtype=compute_dtype)
    w_spec = pl.BlockSpec((K, M), lambda bi, ti: (0, 0))          # weight resident
    y_spec = pl.BlockSpec((1, tn, M), lambda bi, ti: (bi, ti, 0))
    return pl.pallas_call(
        kernel,
        out_shape=[jax.ShapeDtypeStruct((B, N, M), out_dtype)] * 3,
        grid=(B, N // tn),
        in_specs=[pl.BlockSpec((1, tn, K), lambda bi, ti: (bi, ti, 0)),
                  w_spec, w_spec, w_spec],
        out_specs=[y_spec, y_spec, y_spec],
        compiler_params=pltpu.CompilerParams(
            dimension_semantics=("parallel", "parallel"),
            vmem_limit_bytes=vmem_limit_bytes),
    )(x, wq, wk, wv)


# ----------------------------------------------------------------------------
# Pallas kernel: batched linear with bias (to_out)
# ----------------------------------------------------------------------------
def _linear_kernel(x_ref, w_ref, b_ref, o_ref, *, compute_dtype):
    x = x_ref[0].astype(compute_dtype)
    y = jnp.dot(x, w_ref[...].astype(compute_dtype), preferred_element_type=jnp.float32)
    o_ref[0] = (y + b_ref[...]).astype(o_ref.dtype)


def batched_linear(x, w, b, *, compute_dtype=jnp.bfloat16, out_dtype=jnp.float32,
                   tile_n=512, vmem_limit_bytes=_VMEM_LIMIT):
    """x: (B, N, K); w: (K, M); b: (M,) -> (B, N, M)."""
    B, N, K = x.shape
    M = w.shape[1]
    tn = _pick_tile(N, tile_n)
    b2 = b.reshape(1, M).astype(jnp.float32)
    kernel = functools.partial(_linear_kernel, compute_dtype=compute_dtype)
    return pl.pallas_call(
        kernel,
        out_shape=jax.ShapeDtypeStruct((B, N, M), out_dtype),
        grid=(B, N // tn),
        in_specs=[pl.BlockSpec((1, tn, K), lambda bi, ti: (bi, ti, 0)),
                  pl.BlockSpec((K, M), lambda bi, ti: (0, 0)),     # weight resident
                  pl.BlockSpec((1, M), lambda bi, ti: (0, 0))],
        out_specs=pl.BlockSpec((1, tn, M), lambda bi, ti: (bi, ti, 0)),
        compiler_params=pltpu.CompilerParams(
            dimension_semantics=("parallel", "parallel"),
            vmem_limit_bytes=vmem_limit_bytes),
    )(x, w, b2)


# ----------------------------------------------------------------------------
# Pallas kernels: fused attention per (batch, q-tile), head loop inside
# ----------------------------------------------------------------------------
def _attn_kernel(q_ref, k_ref, v_ref, o_ref, a_ref, *,
                 scale, heads, dh, n_true, compute_dtype):
    # q_ref: (1,TQ,inner) bf16 ; k_ref/v_ref: (1,NP,inner) bf16
    # o_ref: (1,TQ,inner) bf16 ; a_ref: (1,H,TQ,NP) bf16
    q = q_ref[0]
    k = k_ref[0]
    v = v_ref[0]
    tq = q.shape[0]
    npad = k.shape[0]
    need_mask = npad != n_true
    if need_mask:
        col = jax.lax.broadcasted_iota(jnp.int32, (tq, npad), 1)
        key_ok = col < n_true
    outs = []
    for h in range(heads):
        qh = q[:, h * dh:(h + 1) * dh]
        kh = k[:, h * dh:(h + 1) * dh]
        vh = v[:, h * dh:(h + 1) * dh]
        dots = jax.lax.dot_general(qh, kh, (((1,), (1,)), ((), ())),
                                   preferred_element_type=jnp.float32) * scale
        if need_mask:
            dots = jnp.where(key_ok, dots, -1e30)
        m = jnp.max(dots, axis=-1, keepdims=True)
        e = jnp.exp(dots - m)
        inv = pl.reciprocal(jnp.sum(e, axis=-1, keepdims=True), approx=True)
        attn0 = e * inv
        a_ref[0, h] = attn0.astype(a_ref.dtype)
        outs.append(jnp.dot(attn0.astype(compute_dtype), vh,
                            preferred_element_type=jnp.float32))
    o_ref[0] = jnp.concatenate(outs, axis=-1).astype(o_ref.dtype)


def _attn_policy_kernel(pol_ref, q_ref, k_ref, v_ref, o_ref, a_ref, *,
                        scale, heads, dh, n_true, tq, eps, compute_dtype):
    # pol_ref: (1,1,NP) f32 -- token keep-policy in [0,1]
    q = q_ref[0]
    k = k_ref[0]
    v = v_ref[0]
    npad = k.shape[0]
    need_mask = npad != n_true
    row = pl.program_id(1) * tq + jax.lax.broadcasted_iota(jnp.int32, (tq, npad), 0)
    col = jax.lax.broadcasted_iota(jnp.int32, (tq, npad), 1)
    p = pol_ref[0]                                   # (1, NP)
    ap = jnp.where(row == col, 1.0, p)               # (TQ, NP), diag forced to 1
    outs = []
    for h in range(heads):
        qh = q[:, h * dh:(h + 1) * dh]
        kh = k[:, h * dh:(h + 1) * dh]
        vh = v[:, h * dh:(h + 1) * dh]
        dots = jax.lax.dot_general(qh, kh, (((1,), (1,)), ((), ())),
                                   preferred_element_type=jnp.float32) * scale
        if need_mask:
            dots = jnp.where(col < n_true, dots, -1e30)
        m = jnp.max(dots, axis=-1, keepdims=True)
        e0 = jnp.exp(dots - m)
        # plain softmax(dots0) -- second return value of the module
        attn0 = e0 * pl.reciprocal(jnp.sum(e0, axis=-1, keepdims=True), approx=True)
        a_ref[0, h] = attn0.astype(a_ref.dtype)
        # softmax_with_policy(dots, policy)
        e1 = e0 * ap
        inv_d = pl.reciprocal(jnp.sum(e1, axis=-1, keepdims=True) + eps, approx=True)
        attn_p = (e1 + eps / n_true) * inv_d
        outs.append(jnp.dot(attn_p.astype(compute_dtype), vh,
                            preferred_element_type=jnp.float32))
    o_ref[0] = jnp.concatenate(outs, axis=-1).astype(o_ref.dtype)


def _attention_pallas(q, k, v, *, policy, scale, heads, dh, n_true,
                      compute_dtype=jnp.bfloat16, attn_dtype=jnp.bfloat16,
                      tile_q=256, vmem_limit_bytes=_VMEM_LIMIT):
    """q,k,v: (B, NP, inner) bf16 -> (out (B,NP,inner) bf16, attn0 (B,H,NP,NP) bf16)."""
    B, npad, inner = q.shape
    tq = _pick_tile(npad, tile_q)
    grid = (B, npad // tq)
    q_spec = pl.BlockSpec((1, tq, inner), lambda b, t: (b, t, 0))
    kv_spec = pl.BlockSpec((1, npad, inner), lambda b, t: (b, 0, 0))
    out_specs = [
        pl.BlockSpec((1, tq, inner), lambda b, t: (b, t, 0)),
        pl.BlockSpec((1, heads, tq, npad), lambda b, t: (b, 0, t, 0)),
    ]
    out_shape = [
        jax.ShapeDtypeStruct((B, npad, inner), attn_dtype),
        jax.ShapeDtypeStruct((B, heads, npad, npad), attn_dtype),
    ]
    cp = pltpu.CompilerParams(
        dimension_semantics=("parallel", "arbitrary"),   # K/V resident across q-tiles
        vmem_limit_bytes=vmem_limit_bytes)

    if policy is None:
        kernel = functools.partial(_attn_kernel, scale=scale, heads=heads, dh=dh,
                                   n_true=n_true, compute_dtype=compute_dtype)
        out_h, attn0 = pl.pallas_call(
            kernel, out_shape=out_shape, grid=grid,
            in_specs=[q_spec, kv_spec, kv_spec],
            out_specs=out_specs, compiler_params=cp,
        )(q, k, v)
        return out_h, attn0

    pol_spec = pl.BlockSpec((1, 1, npad), lambda b, t: (b, 0, 0))
    kernel = functools.partial(_attn_policy_kernel, scale=scale, heads=heads, dh=dh,
                               n_true=n_true, tq=tq, eps=1e-6,
                               compute_dtype=compute_dtype)
    out_h, attn0 = pl.pallas_call(
        kernel, out_shape=out_shape, grid=grid,
        in_specs=[pol_spec, q_spec, kv_spec, kv_spec],
        out_specs=out_specs, compiler_params=cp,
    )(policy, q, k, v)
    return out_h, attn0


# ----------------------------------------------------------------------------
# AttentionDvit forward
# ----------------------------------------------------------------------------
def attention_dvit_forward(x, params, *, heads, dim_head, num_patches,
                           policy=None, rpe=True,
                           compute_dtype=jnp.bfloat16):
    del num_patches, rpe  # see TODO below
    B, N, D = x.shape
    inner = heads * dim_head
    scale = dim_head ** (-0.5)
    project_out = not (heads == 1 and dim_head == D)

    # Pad N so q-tiles / attn-map blocks stay (8,128)-friendly; padded keys masked.
    npad = _round_up(N, 128) if N > 128 else _round_up(N, 8)
    x_p = jnp.pad(x, ((0, 0), (0, npad - N), (0, 0))) if npad != N else x

    # to_qkv (no bias): bf16 weights, three lane-dense bf16 outputs in (B, N, H*dh).
    w_qkv = params["w_qkv"].astype(compute_dtype)
    wq, wk, wv = w_qkv[:, :inner], w_qkv[:, inner:2 * inner], w_qkv[:, 2 * inner:]
    q, k, v = qkv_projection(x_p, wq, wk, wv, compute_dtype=compute_dtype)

    pol_p = None
    if policy is not None:
        pol_p = policy.reshape(B, 1, N).astype(jnp.float32)
        if npad != N:
            pol_p = jnp.pad(pol_p, ((0, 0), (0, 0), (0, npad - N)))

    out_h, attn0 = _attention_pallas(q, k, v, policy=pol_p, scale=scale,
                                     heads=heads, dh=dim_head, n_true=N,
                                     compute_dtype=compute_dtype)

    if project_out:
        out = batched_linear(out_h, params["w_out"].astype(compute_dtype),
                             params["b_out"], compute_dtype=compute_dtype,
                             out_dtype=jnp.float32)
    else:
        out = out_h.astype(jnp.float32)

    if npad != N:
        out = out[:, :N]
        attn0 = attn0[:, :, :N, :N]
    # TODO(synk): the rpe branch of the PyTorch module builds
    # relative_position_bias / pos_embed but never applies them (dots = dots0 in
    # both branches), and to_out's Dropout has p=0.0 -> both are output-neutral
    # and omitted here.
    return out, attn0


# ----------------------------------------------------------------------------
# Pure-JAX reference (mirrors the kernels' bf16 matmul / storage rounding)
# ----------------------------------------------------------------------------
def _reference(x, params, *, heads, dim_head, policy=None, eps=1e-6):
    def r(a):  # bf16 rounding (matmul operands / bf16 HBM storage), f32 accumulate
        return a.astype(jnp.bfloat16).astype(jnp.float32)

    B, N, D = x.shape
    inner = heads * dim_head
    scale = dim_head ** (-0.5)
    qkv = r(jnp.einsum("bnk,km->bnm", r(x), r(params["w_qkv"])))
    qkv = qkv.reshape(B, N, 3, heads, dim_head)
    q, k, v = (jnp.transpose(qkv[:, :, i], (0, 2, 1, 3)) for i in range(3))
    dots = jnp.einsum("bhqd,bhkd->bhqk", q, k) * scale
    m = jnp.max(dots, axis=-1, keepdims=True)
    e = jnp.exp(dots - m)
    attn0 = e / jnp.sum(e, axis=-1, keepdims=True)
    if policy is None:
        attn = attn0
    else:
        ap = policy.reshape(B, 1, 1, N).astype(jnp.float32)
        eye = jnp.eye(N, dtype=jnp.float32).reshape(1, 1, N, N)
        ap = ap + (1.0 - ap) * eye
        e1 = e * ap
        attn = (e1 + eps / N) / (jnp.sum(e1, axis=-1, keepdims=True) + eps)
    out = r(jnp.einsum("bhqk,bhkd->bhqd", r(attn), v))
    out = jnp.transpose(out, (0, 2, 1, 3)).reshape(B, N, inner)
    out = jnp.einsum("bnk,km->bnm", r(out), r(params["w_out"])) + params["b_out"]
    return out, attn0


if __name__ == "__main__":
    B, NP, DIM, HEADS, DH = 2, 16, 16, 2, 8        # num_patches=16 -> 4x4 grid
    INNER = HEADS * DH

    key = jax.random.PRNGKey(0)
    kx, kq, ko, kb, kpol = jax.random.split(key, 5)
    x = jax.random.normal(kx, (B, NP, DIM), jnp.float32)
    params = {
        "w_qkv": jax.random.normal(kq, (DIM, INNER * 3), jnp.float32) * 0.1,
        "w_out": jax.random.normal(ko, (INNER, DIM), jnp.float32) * 0.1,
        "b_out": jax.random.normal(kb, (DIM,), jnp.float32) * 0.1,
    }
    TOL = dict(atol=1e-2, rtol=1e-2)   # bf16 HBM storage + approx reciprocal

    # ---- default path: policy=None (attn = softmax(dots0)) ----
    out, attn0 = attention_dvit_forward(x, params, heads=HEADS, dim_head=DH,
                                        num_patches=NP)
    out, attn0 = jax.block_until_ready((out, attn0))
    ref_out, ref_attn = _reference(x, params, heads=HEADS, dim_head=DH)
    assert out.shape == (B, NP, DIM)
    assert attn0.shape == (B, HEADS, NP, NP)
    assert jnp.allclose(out, ref_out, **TOL)
    assert jnp.allclose(attn0.astype(jnp.float32), ref_attn, **TOL)

    # ---- softmax_with_policy path ----
    policy = (jax.random.uniform(kpol, (B, NP, 1)) > 0.3).astype(jnp.float32)
    out_p, attn0_p = attention_dvit_forward(x, params, heads=HEADS, dim_head=DH,
                                            num_patches=NP, policy=policy)
    out_p, attn0_p = jax.block_until_ready((out_p, attn0_p))
    ref_out_p, ref_attn_p = _reference(x, params, heads=HEADS, dim_head=DH,
                                       policy=policy)
    assert jnp.allclose(out_p, ref_out_p, **TOL)
    assert jnp.allclose(attn0_p.astype(jnp.float32), ref_attn_p, **TOL)

    # ---- non-aligned N (exercise padding + key masking) ----
    N2 = 12
    x2 = x[:, :N2]
    pol2 = policy[:, :N2]
    out2, attn2 = attention_dvit_forward(x2, params, heads=HEADS, dim_head=DH,
                                         num_patches=NP, policy=pol2)
    out2, attn2 = jax.block_until_ready((out2, attn2))
    ref_out2, ref_attn2 = _reference(x2, params, heads=HEADS, dim_head=DH,
                                     policy=pol2)
    assert out2.shape == (B, N2, DIM)
    assert attn2.shape == (B, HEADS, N2, N2)
    assert jnp.allclose(out2, ref_out2, **TOL)
    assert jnp.allclose(attn2.astype(jnp.float32), ref_attn2, **TOL)

    print("KERNEL_OK")
</pallas_src>

<mosaic_0001>
module attributes {stable_mosaic.version = 11 : i64} {
  func.func @_qkv_kernel(%arg0: i32, %arg1: i32, %arg2: memref<1x16x16xf32, #tpu.memory_space<vmem>>, %arg3: memref<16x16xbf16, #tpu.memory_space<vmem>>, %arg4: memref<16x16xbf16, #tpu.memory_space<vmem>>, %arg5: memref<16x16xbf16, #tpu.memory_space<vmem>>, %arg6: memref<1x16x16xbf16, #tpu.memory_space<vmem>>, %arg7: memref<1x16x16xbf16, #tpu.memory_space<vmem>>, %arg8: memref<1x16x16xbf16, #tpu.memory_space<vmem>>) attributes {dimension_semantics = [#tpu.dimension_semantics<parallel>, #tpu.dimension_semantics<parallel>], iteration_bounds = array<i64: 2, 1>, scalar_prefetch = 0 : i64, scratch_operands = 0 : i64, tpu.core_type = #tpu.core_type<tc>, window_params = [{transform_indices = @transform_0, window_bounds = array<i64: 1, 16, 16>}, {pipeline_mode = #tpu.pipeline_mode<synchronous>, transform_indices = @transform_1, window_bounds = array<i64: 16, 16>}, {pipeline_mode = #tpu.pipeline_mode<synchronous>, transform_indices = @transform_2, window_bounds = array<i64: 16, 16>}, {pipeline_mode = #tpu.pipeline_mode<synchronous>, transform_indices = @transform_3, window_bounds = array<i64: 16, 16>}, {transform_indices = @transform_4, window_bounds = array<i64: 1, 16, 16>}, {transform_indices = @transform_5, window_bounds = array<i64: 1, 16, 16>}, {transform_indices = @transform_6, window_bounds = array<i64: 1, 16, 16>}]} {
    %c0 = arith.constant 0 : index
    %c0_0 = arith.constant 0 : index
    %c0_1 = arith.constant 0 : index
    %0 = vector.load %arg2[%c0, %c0_0, %c0_1] : memref<1x16x16xf32, #tpu.memory_space<vmem>>, vector<1x16x16xf32>
    %1 = vector.shape_cast %0 : vector<1x16x16xf32> to vector<16x16xf32>
    %2 = arith.truncf %1 : vector<16x16xf32> to vector<16x16xbf16>
    %c0_2 = arith.constant 0 : index
    %c0_3 = arith.constant 0 : index
    %3 = vector.load %arg3[%c0_2, %c0_3] : memref<16x16xbf16, #tpu.memory_space<vmem>>, vector<16x16xbf16>
    %cst = arith.constant dense<0.000000e+00> : vector<16x16xf32>
    %4 = tpu.matmul %2, %3, %cst {dimension_numbers = #tpu.dot_dimension_numbers<[1], [0], [0], [1], [0, 0, 1, 1], [], []>} : vector<16x16xbf16>, vector<16x16xbf16>, vector<16x16xf32> -> vector<16x16xf32>
    %5 = arith.truncf %4 : vector<16x16xf32> to vector<16x16xbf16>
    %c0_4 = arith.constant 0 : index
    %c0_5 = arith.constant 0 : index
    %c0_6 = arith.constant 0 : index
    %6 = vector.load %arg6[%c0_4, %c0_5, %c0_6] : memref<1x16x16xbf16, #tpu.memory_space<vmem>>, vector<1x16x16xbf16>
    %7 = vector.shape_cast %6 : vector<1x16x16xbf16> to vector<16x16xbf16>
    %8 = vector.shape_cast %5 : vector<16x16xbf16> to vector<1x16x16xbf16>
    tpu.vector_store %arg6[%c0_4, %c0_5, %c0_6], %8 {strides = array<i32>} : memref<1x16x16xbf16, #tpu.memory_space<vmem>>, vector<1x16x16xbf16>,
    %c0_7 = arith.constant 0 : index
    %c0_8 = arith.constant 0 : index
    %9 = vector.load %arg4[%c0_7, %c0_8] : memref<16x16xbf16, #tpu.memory_space<vmem>>, vector<16x16xbf16>
    %cst_9 = arith.constant dense<0.000000e+00> : vector<16x16xf32>
    %10 = tpu.matmul %2, %9, %cst_9 {dimension_numbers = #tpu.dot_dimension_numbers<[1], [0], [0], [1], [0, 0, 1, 1], [], []>} : vector<16x16xbf16>, vector<16x16xbf16>, vector<16x16xf32> -> vector<16x16xf32>
    %11 = arith.truncf %10 : vector<16x16xf32> to vector<16x16xbf16>
    %c0_10 = arith.constant 0 : index
    %c0_11 = arith.constant 0 : index
    %c0_12 = arith.constant 0 : index
    %12 = vector.load %arg7[%c0_10, %c0_11, %c0_12] : memref<1x16x16xbf16, #tpu.memory_space<vmem>>, vector<1x16x16xbf16>
    %13 = vector.shape_cast %12 : vector<1x16x16xbf16> to vector<16x16xbf16>
    %14 = vector.shape_cast %11 : vector<16x16xbf16> to vector<1x16x16xbf16>
    tpu.vector_store %arg7[%c0_10, %c0_11, %c0_12], %14 {strides = array<i32>} : memref<1x16x16xbf16, #tpu.memory_space<vmem>>, vector<1x16x16xbf16>,
    %c0_13 = arith.constant 0 : index
    %c0_14 = arith.constant 0 : index
    %15 = vector.load %arg5[%c0_13, %c0_14] : memref<16x16xbf16, #tpu.memory_space<vmem>>, vector<16x16xbf16>
    %cst_15 = arith.constant dense<0.000000e+00> : vector<16x16xf32>
    %16 = tpu.matmul %2, %15, %cst_15 {dimension_numbers = #tpu.dot_dimension_numbers<[1], [0], [0], [1], [0, 0, 1, 1], [], []>} : vector<16x16xbf16>, vector<16x16xbf16>, vector<16x16xf32> -> vector<16x16xf32>
    %17 = arith.truncf %16 : vector<16x16xf32> to vector<16x16xbf16>
    %c0_16 = arith.constant 0 : index
    %c0_17 = arith.constant 0 : index
    %c0_18 = arith.constant 0 : index
    %18 = vector.load %arg8[%c0_16, %c0_17, %c0_18] : memref<1x16x16xbf16, #tpu.memory_space<vmem>>, vector<1x16x16xbf16>
    %19 = vector.shape_cast %18 : vector<1x16x16xbf16> to vector<16x16xbf16>
    %20 = vector.shape_cast %17 : vector<16x16xbf16> to vector<1x16x16xbf16>
    tpu.vector_store %arg8[%c0_16, %c0_17, %c0_18], %20 {strides = array<i32>} : memref<1x16x16xbf16, #tpu.memory_space<vmem>>, vector<1x16x16xbf16>,
    return
  }
  func.func @transform_0(%arg0: i32, %arg1: i32) -> (i32, i32, i32) {
    %c0_i32 = arith.constant 0 : i32
    %c0_i32_0 = arith.constant 0 : i32
    return %arg0, %arg1, %c0_i32 : i32, i32, i32
  }
  func.func @transform_1(%arg0: i32, %arg1: i32) -> (i32, i32) {
    %c0_i32 = arith.constant 0 : i32
    %c0_i32_0 = arith.constant 0 : i32
    %c0_i32_1 = arith.constant 0 : i32
    return %c0_i32, %c0_i32_0 : i32, i32
  }
  func.func @transform_2(%arg0: i32, %arg1: i32) -> (i32, i32) {
    %c0_i32 = arith.constant 0 : i32
    %c0_i32_0 = arith.constant 0 : i32
    %c0_i32_1 = arith.constant 0 : i32
    return %c0_i32, %c0_i32_0 : i32, i32
  }
  func.func @transform_3(%arg0: i32, %arg1: i32) -> (i32, i32) {
    %c0_i32 = arith.constant 0 : i32
    %c0_i32_0 = arith.constant 0 : i32
    %c0_i32_1 = arith.constant 0 : i32
    return %c0_i32, %c0_i32_0 : i32, i32
  }
  func.func @transform_4(%arg0: i32, %arg1: i32) -> (i32, i32, i32) {
    %c0_i32 = arith.constant 0 : i32
    %c0_i32_0 = arith.constant 0 : i32
    return %arg0, %arg1, %c0_i32 : i32, i32, i32
  }
  func.func @transform_5(%arg0: i32, %arg1: i32) -> (i32, i32, i32) {
    %c0_i32 = arith.constant 0 : i32
    %c0_i32_0 = arith.constant 0 : i32
    return %arg0, %arg1, %c0_i32 : i32, i32, i32
  }
  func.func @transform_6(%arg0: i32, %arg1: i32) -> (i32, i32, i32) {
    %c0_i32 = arith.constant 0 : i32
    %c0_i32_0 = arith.constant 0 : i32
    return %arg0, %arg1, %c0_i32 : i32, i32, i32
  }
}

</mosaic_0001>

<llo_original>
// kernel: tpu_custom_call.1
$region0: #{tpu_custom_call.1}
  #allocation0 [shape = 'u32[]', space=smem, size = 0x4, offset = 0x4, fixed_abs, tag = 'smem constant byte address 0x4 - core index']
  #allocation1 [shape = 'u32[72,128]{1,0:T(1,128)}', space=vmem, size = 0x9000, scoped, tag = 'internal scratch']
  %s0 = inlined_call_operand.hbm [shape: f32[2,16,16], index: 0, kind: input, shape index: {}]
  %s1 = inlined_call_operand.hbm [shape: bf16[16,16], index: 1, kind: input, shape index: {}]
  %s2 = inlined_call_operand.hbm [shape: bf16[16,16], index: 2, kind: input, shape index: {}]
  %s3 = inlined_call_operand.hbm [shape: bf16[16,16], index: 3, kind: input, shape index: {}]
  %s4 = inlined_call_operand.hbm [shape: bf16[2,16,16], index: 4, kind: output, shape index: {0}]
  %s5 = inlined_call_operand.hbm [shape: bf16[2,16,16], index: 5, kind: output, shape index: {1}]
  %s6 = inlined_call_operand.hbm [shape: bf16[2,16,16], index: 6, kind: output, shape index: {2}]
  %7 = xla_tuple %s4, %s5, %s6
  %s8 = sld [smem:[#allocation0]]
  $region81: #{tpu_custom_call.1} parent=0
    _
  %s10 = ssub.s32 1, %s8
  %s11 = scalar_select 0, %s10, %s8
  $region1: #{tpu_custom_call.1} parent=0
    #allocation2 [shape = 'u8[16384]{0}', space=vmem, size = 0x4000, scoped, tag = 'input window, operand 0']
    #allocation3 [shape = 's32[2]{0}', space=sflag, size = 0x8, scoped, tag = 'scoped memory for tpu_custom_call.1']
    #allocation4 [shape = 's32[2]{0}', space=sflag, size = 0x8, scoped, tag = 'scoped memory for tpu_custom_call.1']
    #allocation5 [shape = 'u8[4096]{0}', space=vmem, size = 0x1000, scoped, tag = 'input window, operand 1, single buffered']
    #allocation6 [shape = 's32[1]{0}', space=sflag, size = 0x4, scoped, tag = 'scoped memory for tpu_custom_call.1']
    #allocation7 [shape = 'u8[4096]{0}', space=vmem, size = 0x1000, scoped, tag = 'input window, operand 2, single buffered']
    #allocation8 [shape = 'u8[4096]{0}', space=vmem, size = 0x1000, scoped, tag = 'input window, operand 3, single buffered']
    #allocation9 [shape = 's32[1]{0}', space=sflag, size = 0x4, scoped, tag = 'scoped memory for tpu_custom_call.1']
    #allocation10 [shape = 'u8[8192]{0}', space=vmem, size = 0x2000, scoped, tag = 'output window, operand 0']
    #allocation11 [shape = 'u8[8192]{0}', space=vmem, size = 0x2000, scoped, tag = 'output window, operand 1']
    #allocation12 [shape = 's32[2]{0}', space=sflag, size = 0x8, scoped, tag = 'scoped memory for tpu_custom_call.1']
    #allocation13 [shape = 'u8[8192]{0}', space=vmem, size = 0x2000, scoped, tag = 'output window, operand 2']
    %12 = vsyncpa [#allocation3], 0
    %s13 = scalar_lea.sflag [#allocation3], 1
    %14 = vsyncpa %s13, 0
    %15 = vsyncpa [#allocation6], 0
    %16 = vsyncpa [#allocation9], 0
    %17 = vsyncpa [#allocation4], 0
    %s18 = scalar_lea.sflag [#allocation4], 1
    %19 = vsyncpa %s18, 0
    %20 = vsyncpa [#allocation12], 0
    %s21 = scalar_lea.sflag [#allocation12], 1
    %22 = vsyncpa %s21, 0
    loop: start=0, step=1, limit=4
    $region2: #{tpu_custom_call.1} parent=1 // loop_pre_header
      _
    $region3: #{tpu_custom_call.1} parent=1 // loop_header
      %s24 = sphi 0, %s28
      %p25 = scmp.ge.s32.totalorder %s24, 4
      %s31 = sphi 0, %s43
      %s32 = sphi 0, %s39
      %s33 = sphi 0, %s31
      %s34 = sphi 0, %s32
      %s35 = sphi 0, %s33
      %s36 = sphi 0, %s34
      %s48 = sphi 0, %s50
      %s51 = sphi 0, %s48
      %s52 = sphi 0, %s51
      %s68 = sphi 0, %s52
      %s72 = sphi 0, %s72
      %s74 = sphi 0, %s72
      %s75 = sphi 0, %s74
      %s89 = sphi 0, %s75
      %s93 = sphi 0, %s93
      %s95 = sphi 0, %s93
      %s96 = sphi 0, %s95
      %s110 = sphi 0, %s96
      %s114 = sphi 0, %s114
      %s116 = sphi 0, %s114
      %s117 = sphi 0, %s116
      %s131 = sphi 0, %s117
      %s139 = sphi 0, %s141
      %s142 = sphi 0, %s139
      %s143 = sphi 0, %s142
      %s159 = sphi 0, %s143
      %s167 = sphi 0, %s169
      %s170 = sphi 0, %s167
      %s171 = sphi 0, %s170
      %s187 = sphi 0, %s171
      %s195 = sphi 0, %s197
      %s198 = sphi 0, %s195
      %s199 = sphi 0, %s198
      %s215 = sphi 0, %s199
    $region4: #{tpu_custom_call.1} parent=1 // loop_header_branch
      %27 = sbr.rel (%p25) target = $region8
    $region5: #{tpu_custom_call.1} parent=1 // loop_body
      %s29 = ssub.s32 %s24, 1
      %s30 = ssub.s32 %s24, 2
      %s37 = sadd.s32 1, %s32
      %p38 = scmp.ge.s32.totalorder %s37, 1
      %s39 = scalar_select %p38, 0, %s37
      %s40 = sadd.s32 1, %s31
      %s41 = scalar_select %p38, %s40, %s31
      %p42 = scmp.ge.s32.totalorder %s41, 2
      %s43 = scalar_select %p42, 0, %s41
      %s44 = ssub.s32 %s31, %s43
      %s45 = ssub.s32 %s32, %s39
      %s46 = sor.u32 %s44, %s45
      %p47 = scmp.eq.s32.totalorder %s46, 0
      %s49 = sadd.s32 %s48, 1
      %s50 = scalar_select %p47, %s48, %s49
      %p53 = pneg %p47
      %p54 = scmp.eq.s32.totalorder %s24, 1
      %p55 = por %p53, %p54
      %p56 = scmp.ne.s32.totalorder %s48, %s51
      %p57 = scmp.eq.s32.totalorder %s24, 0
      %p58 = por %p56, %p57
      %p59 = scmp.ne.s32.totalorder %s48, %s51
      %p60 = scmp.eq.s32.totalorder %s29, 1
      %p61 = por %p59, %p60
      %p62 = scmp.ne.s32.totalorder %s51, %s52
      %p63 = scmp.eq.s32.totalorder %s29, 0
      %p64 = por %p62, %p63
      %p65 = scmp.ne.s32.totalorder %s51, %s52
      %p66 = scmp.eq.s32.totalorder %s30, 1
      %p67 = por %p65, %p66
      %p69 = scmp.ne.s32.totalorder %s52, %s68
      %p70 = scmp.eq.s32.totalorder %s30, 0
      %p71 = por %p69, %p70
      %s73 = sadd.s32 %s72, 1
      %p76 = scmp.eq.s32.totalorder %s24, 1
      %p77 = scmp.ne.s32.totalorder %s72, %s74
      %p78 = scmp.eq.s32.totalorder %s24, 0
      %p79 = por %p77, %p78
      %p80 = scmp.ne.s32.totalorder %s72, %s74
      %p81 = scmp.eq.s32.totalorder %s29, 1
      %p82 = por %p80, %p81
      %p83 = scmp.ne.s32.totalorder %s74, %s75
      %p84 = scmp.eq.s32.totalorder %s29, 0
      %p85 = por %p83, %p84
      %p86 = scmp.ne.s32.totalorder %s74, %s75
      %p87 = scmp.eq.s32.totalorder %s30, 1
      %p88 = por %p86, %p87
      %p90 = scmp.ne.s32.totalorder %s75, %s89
      %p91 = scmp.eq.s32.totalorder %s30, 0
      %p92 = por %p90, %p91
      %s94 = sadd.s32 %s93, 1
      %p97 = scmp.eq.s32.totalorder %s24, 1
      %p98 = scmp.ne.s32.totalorder %s93, %s95
      %p99 = scmp.eq.s32.totalorder %s24, 0
      %p100 = por %p98, %p99
      %p101 = scmp.ne.s32.totalorder %s93, %s95
      %p102 = scmp.eq.s32.totalorder %s29, 1
      %p103 = por %p101, %p102
      %p104 = scmp.ne.s32.totalorder %s95, %s96
      %p105 = scmp.eq.s32.totalorder %s29, 0
      %p106 = por %p104, %p105
      %p107 = scmp.ne.s32.totalorder %s95, %s96
      %p108 = scmp.eq.s32.totalorder %s30, 1
      %p109 = por %p107, %p108
      %p111 = scmp.ne.s32.totalorder %s96, %s110
      %p112 = scmp.eq.s32.totalorder %s30, 0
      %p113 = por %p111, %p112
      %s115 = sadd.s32 %s114, 1
      %p118 = scmp.eq.s32.totalorder %s24, 1
      %p119 = scmp.ne.s32.totalorder %s114, %s116
      %p120 = scmp.eq.s32.totalorder %s24, 0
      %p121 = por %p119, %p120
      %p122 = scmp.ne.s32.totalorder %s114, %s116
      %p123 = scmp.eq.s32.totalorder %s29, 1
      %p124 = por %p122, %p123
      %p125 = scmp.ne.s32.totalorder %s116, %s117
      %p126 = scmp.eq.s32.totalorder %s29, 0
      %p127 = por %p125, %p126
      %p128 = scmp.ne.s32.totalorder %s116, %s117
      %p129 = scmp.eq.s32.totalorder %s30, 1
      %p130 = por %p128, %p129
      %p132 = scmp.ne.s32.totalorder %s117, %s131
      %p133 = scmp.eq.s32.totalorder %s30, 0
      %p134 = por %p132, %p133
      %s135 = ssub.s32 %s31, %s43
      %s136 = ssub.s32 %s32, %s39
      %s137 = sor.u32 %s135, %s136
      %p138 = scmp.eq.s32.totalorder %s137, 0
      %s140 = sadd.s32 %s139, 1
      %s141 = scalar_select %p138, %s139, %s140
      %p144 = pneg %p138
      %p145 = scmp.eq.s32.totalorder %s24, 1
      %p146 = por %p144, %p145
      %p147 = scmp.ne.s32.totalorder %s139, %s142
      %p148 = scmp.eq.s32.totalorder %s24, 0
      %p149 = por %p147, %p148
      %p150 = scmp.ne.s32.totalorder %s139, %s142
      %p151 = scmp.eq.s32.totalorder %s29, 1
      %p152 = por %p150, %p151
      %p153 = scmp.ne.s32.totalorder %s142, %s143
      %p154 = scmp.eq.s32.totalorder %s29, 0
      %p155 = por %p153, %p154
      %p156 = scmp.ne.s32.totalorder %s142, %s143
      %p157 = scmp.eq.s32.totalorder %s30, 1
      %p158 = por %p156, %p157
      %p160 = scmp.ne.s32.totalorder %s143, %s159
      %p161 = scmp.eq.s32.totalorder %s30, 0
      %p162 = por %p160, %p161
      %s163 = ssub.s32 %s31, %s43
      %s164 = ssub.s32 %s32, %s39
      %s165 = sor.u32 %s163, %s164
      %p166 = scmp.eq.s32.totalorder %s165, 0
      %s168 = sadd.s32 %s167, 1
      %s169 = scalar_select %p166, %s167, %s168
      %p172 = pneg %p166
      %p173 = scmp.eq.s32.totalorder %s24, 1
      %p174 = por %p172, %p173
      %p175 = scmp.ne.s32.totalorder %s167, %s170
      %p176 = scmp.eq.s32.totalorder %s24, 0
      %p177 = por %p175, %p176
      %p178 = scmp.ne.s32.totalorder %s167, %s170
      %p179 = scmp.eq.s32.totalorder %s29, 1
      %p180 = por %p178, %p179
      %p181 = scmp.ne.s32.totalorder %s170, %s171
      %p182 = scmp.eq.s32.totalorder %s29, 0
      %p183 = por %p181, %p182
      %p184 = scmp.ne.s32.totalorder %s170, %s171
      %p185 = scmp.eq.s32.totalorder %s30, 1
      %p186 = por %p184, %p185
      %p188 = scmp.ne.s32.totalorder %s171, %s187
      %p189 = scmp.eq.s32.totalorder %s30, 0
      %p190 = por %p188, %p189
      %s191 = ssub.s32 %s31, %s43
      %s192 = ssub.s32 %s32, %s39
      %s193 = sor.u32 %s191, %s192
      %p194 = scmp.eq.s32.totalorder %s193, 0
      %s196 = sadd.s32 %s195, 1
      %s197 = scalar_select %p194, %s195, %s196
      %p200 = pneg %p194
      %p201 = scmp.eq.s32.totalorder %s24, 1
      %p202 = por %p200, %p201
      %p203 = scmp.ne.s32.totalorder %s195, %s198
      %p204 = scmp.eq.s32.totalorder %s24, 0
      %p205 = por %p203, %p204
      %p206 = scmp.ne.s32.totalorder %s195, %s198
      %p207 = scmp.eq.s32.totalorder %s29, 1
      %p208 = por %p206, %p207
      %p209 = scmp.ne.s32.totalorder %s198, %s199
      %p210 = scmp.eq.s32.totalorder %s29, 0
      %p211 = por %p209, %p210
      %p212 = scmp.ne.s32.totalorder %s198, %s199
      %p213 = scmp.eq.s32.totalorder %s30, 1
      %p214 = por %p212, %p213
      %p216 = scmp.ne.s32.totalorder %s199, %s215
      %p217 = scmp.eq.s32.totalorder %s30, 0
      %p218 = por %p216, %p217
      %p219 = scmp.le.s32.totalorder 1, %s24
      %p220 = scmp.lt.s32.totalorder %s24, 3
      %p221 = pnand %p219, %p220
      %p222 = pneg %p221
      // Predicated region
      $region9: #{tpu_custom_call.1} parent=5 // pred_check
        _
      $region10: #{tpu_custom_call.1} parent=5 // pred_check_branch
        %224 = sbr.rel (%p221) target = $region12
      $region11: #{tpu_custom_call.1} parent=5 // pred_region
        %s225 = ssub.s32 %s24, 1
        // Predicated region
        $region13: #{tpu_custom_call.1} parent=11 // pred_check
          %p226 = pneg %p85
        $region14: #{tpu_custom_call.1} parent=11 // pred_check_branch
          %228 = sbr.rel (%p226) target = $region16
        $region15: #{tpu_custom_call.1} parent=11 // pred_region
          %230 = vsyncadd [#allocation6], 0
          %s231 = sshll.u32 %s1, 4
          %s232 = int_to_ptr.hbm [resolvable:$true] %s231
          %s233 = sshll.u32 [#allocation5], 4
          %s234 = int_to_ptr.vmem [resolvable:$true] %s233
          %239 = dma.hbm_to_vmem [thread:$0]  %s232, 128, %s234, [#allocation6], 64, 64, 4
        $region16: #{tpu_custom_call.1} parent=11 // pred_fallthru
          _
        // Predicated region
        $region17: #{tpu_custom_call.1} parent=11 // pred_check
          %p240 = pneg %p106
        $region18: #{tpu_custom_call.1} parent=11 // pred_check_branch
          %242 = sbr.rel (%p240) target = $region20
        $region19: #{tpu_custom_call.1} parent=11 // pred_region
          %244 = vsyncadd [#allocation6], 0
          %s245 = sshll.u32 %s2, 4
          %s246 = int_to_ptr.hbm [resolvable:$true] %s245
          %s247 = sshll.u32 [#allocation7], 4
          %s248 = int_to_ptr.vmem [resolvable:$true] %s247
          %253 = dma.hbm_to_vmem [thread:$0]  %s246, 128, %s248, [#allocation6], 64, 64, 4
        $region20: #{tpu_custom_call.1} parent=11 // pred_fallthru
          _
        // Predicated region
        $region21: #{tpu_custom_call.1} parent=11 // pred_check
          %p254 = pneg %p127
        $region22: #{tpu_custom_call.1} parent=11 // pred_check_branch
          %256 = sbr.rel (%p254) target = $region24
        $region23: #{tpu_custom_call.1} parent=11 // pred_region
          %258 = vsyncadd [#allocation9], 0
          %s259 = sshll.u32 %s3, 4
          %s260 = int_to_ptr.hbm [resolvable:$true] %s259
          %s261 = sshll.u32 [#allocation8], 4
          %s262 = int_to_ptr.vmem [resolvable:$true] %s261
          %267 = dma.hbm_to_vmem [thread:$0]  %s260, 128, %s262, [#allocation9], 64, 64, 4
        $region24: #{tpu_custom_call.1} parent=11 // pred_fallthru
          _
      $region12: #{tpu_custom_call.1} parent=5 // pred_fallthru
        _
      %p268 = scmp.lt.s32.totalorder %s24, 2
      // Predicated region
      $region25: #{tpu_custom_call.1} parent=5 // pred_check
        %p269 = pneg %p268
      $region26: #{tpu_custom_call.1} parent=5 // pred_check_branch
        %271 = sbr.rel (%p269) target = $region28
      $region27: #{tpu_custom_call.1} parent=5 // pred_region
        // Predicated region
        $region29: #{tpu_custom_call.1} parent=27 // pred_check
          %p272 = pneg %p58
        $region30: #{tpu_custom_call.1} parent=27 // pred_check_branch
          %274 = sbr.rel (%p272) target = $region32
        $region31: #{tpu_custom_call.1} parent=27 // pred_region
          %s275 = sand.u32 %s48, 1
          %s276 = scalar_lea.sflag [#allocation3], %s275
          %s277 = sand.u32 %s48, 1
          %s278 = smul.addr %s277, 16
          %s279 = scalar_lea.vmem [#allocation2], %s278
          %s280 = smul.u32 2, %s32
          %282 = vsyncadd %s276, 0
          %s283 = smul.addr %s31, 2
          %s284 = sadd.s32 %s280, %s283
          %s285 = smul.addr %s284, 8
          %s286 = scalar_lea.hbm %s0, %s285
          %s287 = sshll.u32 %s286, 4
          %s288 = int_to_ptr.hbm [resolvable:$true] %s287
          %s289 = sshll.u32 %s279, 4
          %s290 = int_to_ptr.vmem [resolvable:$true] %s289
          %295 = dma.hbm_to_vmem [thread:$0]  %s288, 256, %s290, %s276, 128, 128, 8
        $region32: #{tpu_custom_call.1} parent=27 // pred_fallthru
          _
      $region28: #{tpu_custom_call.1} parent=5 // pred_fallthru
        _
      %p296 = scmp.le.s32.totalorder 1, %s24
      %p297 = scmp.lt.s32.totalorder %s24, 3
      %p298 = pnand %p296, %p297
      %p299 = pneg %p298
      // Predicated region
      $region33: #{tpu_custom_call.1} parent=5 // pred_check
        _
      $region34: #{tpu_custom_call.1} parent=5 // pred_check_branch
        %301 = sbr.rel (%p298) target = $region36
      $region35: #{tpu_custom_call.1} parent=5 // pred_region
        %s302 = ssub.s32 %s24, 1
        %s303 = sand.u32 %s51, 1
        %s304 = scalar_lea.sflag [#allocation3], %s303
        %s305 = sand.u32 %s51, 1
        %s306 = smul.addr %s305, 16
        %s307 = scalar_lea.vmem [#allocation2], %s306
        // Predicated region
        $region37: #{tpu_custom_call.1} parent=35 // pred_check
          %p308 = pneg %p64
        $region38: #{tpu_custom_call.1} parent=35 // pred_check_branch
          %310 = sbr.rel (%p308) target = $region40
        $region39: #{tpu_custom_call.1} parent=35 // pred_region
          %312 = dma.done %s304, 256
        $region40: #{tpu_custom_call.1} parent=35 // pred_fallthru
          _
        // Predicated region
        $region41: #{tpu_custom_call.1} parent=35 // pred_check
          %p313 = pneg %p85
        $region42: #{tpu_custom_call.1} parent=35 // pred_check_branch
          %315 = sbr.rel (%p313) target = $region44
        $region43: #{tpu_custom_call.1} parent=35 // pred_region
          %317 = dma.done [#allocation6], 128
        $region44: #{tpu_custom_call.1} parent=35 // pred_fallthru
          _
        // Predicated region
        $region45: #{tpu_custom_call.1} parent=35 // pred_check
          %p318 = pneg %p106
        $region46: #{tpu_custom_call.1} parent=35 // pred_check_branch
          %320 = sbr.rel (%p318) target = $region48
        $region47: #{tpu_custom_call.1} parent=35 // pred_region
          %322 = dma.done [#allocation6], 128
        $region48: #{tpu_custom_call.1} parent=35 // pred_fallthru
          _
        // Predicated region
        $region49: #{tpu_custom_call.1} parent=35 // pred_check
          %p323 = pneg %p127
        $region50: #{tpu_custom_call.1} parent=35 // pred_check_branch
          %325 = sbr.rel (%p323) target = $region52
        $region51: #{tpu_custom_call.1} parent=35 // pred_region
          %327 = dma.done [#allocation9], 128
        $region52: #{tpu_custom_call.1} parent=35 // pred_fallthru
          _
        %s328 = sand.u32 %s51, 1
        %s329 = scalar_lea.sflag [#allocation3], %s328
        %s330 = sand.u32 %s51, 1
        %s331 = smul.addr %s330, 16
        %s332 = scalar_lea.vmem [#allocation2], %s331
        %p333 = pneg %p64
        %p334 = pneg %p61
        %p335 = pneg %p85
        %p336 = pneg %p82
        %p337 = pneg %p106
        %p338 = pneg %p103
        %p339 = pneg %p127
        %p340 = pneg %p124
        %p341 = pneg %p155
        %p342 = pneg %p152
        %s343 = sand.u32 %s142, 1
        %s344 = scalar_lea.sflag [#allocation4], %s343
        %s345 = sand.u32 %s142, 1
        %s346 = smul.addr %s345, 8
        %s347 = scalar_lea.vmem [#allocation10], %s346
        %p348 = pneg %p183
        %p349 = pneg %p180
        %s350 = sand.u32 %s29, 1
        %s351 = scalar_lea.sflag [#allocation12], %s350
        %s352 = sand.u32 %s170, 1
        %s353 = smul.addr %s352, 8
        %s354 = scalar_lea.vmem [#allocation11], %s353
        %p355 = pneg %p211
        %p356 = pneg %p208
        %s357 = sand.u32 %s29, 1
        %s358 = scalar_lea.sflag [#allocation12], %s357
        %s359 = sand.u32 %s198, 1
        %s360 = smul.addr %s359, 8
        %s361 = scalar_lea.vmem [#allocation13], %s360
        %s362 = smul.u32 2, %s34
        %s363 = smul.u32 2, %s34
        %s364 = smul.u32 2, %s34
        %s365 = smul.u32 2, %s34
        %v367 = vld [vmem:[%s307] sm:$0xff]
        %v368 = vld [vmem:[%s307 + $0x8] sm:$0xff]
        %v369 = vpack.c.bf16 %v368, %v367
        %v370 = vld [vmem:[#allocation5] sm:$0xf]
        %v371 = vld [vmem:[#allocation5 + $0x4] sm:$0xf]
        %v374 = vunpack.c.l.b16 %v370
        %v375 = vunpack.c.l.b16 %v371
        %v376 = vpack.c.b16 %v375, %v374
        %vm378 = vcmask 130048
        %v380 = vsel %vm378, %v369, 0
        %382 = vmatpush.bf16.msra.mxu0 0
        %383 = vmatpush.bf16.msra.mxu0 0
        %384 = vmatpush.bf16.msra.mxu0 0
        %385 = vmatpush.bf16.msra.mxu0 0
        %386 = vmatpush.bf16.msra.mxu0 0
        %387 = vmatpush.bf16.msra.mxu0 0
        %388 = vmatpush.bf16.msra.mxu0 0
        %389 = vmatpush.bf16.msra.mxu0 %v376
        %390 = vmatmul.bf16.gmra.mxu0 %v380
        %v391 = vpop.f32.mrf.mxu0
        %v392 = vadd.f32 0.0, %v391
        %v393 = vpop.f32.mrf.mxu0
        %v394 = vadd.f32 0.0, %v393
        %395 = vdwg.mxu0
        %v396 = vpack.c.bf16 %v392, %v392
        %v397 = vpack.c.bf16 %v394, %v394
        %vm398 = vcmask 125952
        %399 = vst.msk [vmem:[%s347] sm:$0xf] %vm398, %v396
        %400 = vst.msk [vmem:[%s347 + $0x4] sm:$0xf] %vm398, %v397
        %v401 = vld [vmem:[#allocation7] sm:$0xf]
        %v402 = vld [vmem:[#allocation7 + $0x4] sm:$0xf]
        %v405 = vunpack.c.l.b16 %v401
        %v406 = vunpack.c.l.b16 %v402
        %v407 = vpack.c.b16 %v406, %v405
        %409 = vmatpush.bf16.msra.mxu0 0
        %410 = vmatpush.bf16.msra.mxu0 0
        %411 = vmatpush.bf16.msra.mxu0 0
        %412 = vmatpush.bf16.msra.mxu0 0
        %413 = vmatpush.bf16.msra.mxu0 0
        %414 = vmatpush.bf16.msra.mxu0 0
        %415 = vmatpush.bf16.msra.mxu0 0
        %416 = vmatpush.bf16.msra.mxu0 %v407
        %417 = vmatmul.bf16.gmra.mxu0 %v380
        %v418 = vpop.f32.mrf.mxu0
        %v419 = vadd.f32 0.0, %v418
        %v420 = vpop.f32.mrf.mxu0
        %v421 = vadd.f32 0.0, %v420
        %422 = vdwg.mxu0
        %v423 = vpack.c.bf16 %v419, %v419
        %v424 = vpack.c.bf16 %v421, %v421
        %425 = vst.msk [vmem:[%s354] sm:$0xf] %vm398, %v423
        %426 = vst.msk [vmem:[%s354 + $0x4] sm:$0xf] %vm398, %v424
        %v427 = vld [vmem:[#allocation8] sm:$0xf]
        %v428 = vld [vmem:[#allocation8 + $0x4] sm:$0xf]
        %v431 = vunpack.c.l.b16 %v427
        %v432 = vunpack.c.l.b16 %v428
        %v433 = vpack.c.b16 %v432, %v431
        %435 = vmatpush.bf16.msra.mxu0 0
        %436 = vmatpush.bf16.msra.mxu0 0
        %437 = vmatpush.bf16.msra.mxu0 0
        %438 = vmatpush.bf16.msra.mxu0 0
        %439 = vmatpush.bf16.msra.mxu0 0
        %440 = vmatpush.bf16.msra.mxu0 0
        %441 = vmatpush.bf16.msra.mxu0 0
        %442 = vmatpush.bf16.msra.mxu0 %v433
        %443 = vmatmul.bf16.gmra.mxu0 %v380
        %v444 = vpop.f32.mrf.mxu0
        %v445 = vadd.f32 0.0, %v444
        %v446 = vpop.f32.mrf.mxu0
        %v447 = vadd.f32 0.0, %v446
        %448 = vdwg.mxu0
        %v449 = vpack.c.bf16 %v445, %v445
        %v450 = vpack.c.bf16 %v447, %v447
        %451 = vst.msk [vmem:[%s361] sm:$0xf] %vm398, %v449
        %452 = vst.msk [vmem:[%s361 + $0x4] sm:$0xf] %vm398, %v450
        %s453 = sand.u32 %s142, 1
        %s454 = scalar_lea.sflag [#allocation4], %s453
        %s455 = sand.u32 %s142, 1
        %s456 = smul.addr %s455, 8
        %s457 = scalar_lea.vmem [#allocation10], %s456
        %s458 = sand.u32 %s29, 1
        %s459 = scalar_lea.sflag [#allocation12], %s458
        %s460 = sand.u32 %s170, 1
        %s461 = smul.addr %s460, 8
        %s462 = scalar_lea.vmem [#allocation11], %s461
        %s463 = sand.u32 %s29, 1
        %s464 = scalar_lea.sflag [#allocation12], %s463
        %s465 = sand.u32 %s198, 1
        %s466 = smul.addr %s465, 8
        %s467 = scalar_lea.vmem [#allocation13], %s466
        // Predicated region
        $region53: #{tpu_custom_call.1} parent=35 // pred_check
          %p468 = pneg %p152
        $region54: #{tpu_custom_call.1} parent=35 // pred_check_branch
          %470 = sbr.rel (%p468) target = $region56
        $region55: #{tpu_custom_call.1} parent=35 // pred_region
          %s471 = smul.u32 2, %s34
          %473 = vsyncadd %s454, 0
          %s474 = smul.addr %s33, 2
          %s475 = sadd.s32 %s471, %s474
          %s476 = smul.addr %s475, 4
          %s477 = scalar_lea.hbm %s4, %s476
          %s478 = sshll.u32 %s457, 4
          %s479 = int_to_ptr.vmem [resolvable:$true] %s478
          %s480 = sshll.u32 %s477, 4
          %s481 = int_to_ptr.hbm [resolvable:$true] %s480
          %486 = dma.vmem_to_hbm [thread:$0]  %s479, 128, %s481, %s454, 64, 64, 4
        $region56: #{tpu_custom_call.1} parent=35 // pred_fallthru
          _
        // Predicated region
        $region57: #{tpu_custom_call.1} parent=35 // pred_check
          %p487 = pneg %p180
        $region58: #{tpu_custom_call.1} parent=35 // pred_check_branch
          %489 = sbr.rel (%p487) target = $region60
        $region59: #{tpu_custom_call.1} parent=35 // pred_region
          %s490 = smul.u32 2, %s34
          %492 = vsyncadd %s459, 0
          %s493 = smul.addr %s33, 2
          %s494 = sadd.s32 %s490, %s493
          %s495 = smul.addr %s494, 4
          %s496 = scalar_lea.hbm %s5, %s495
          %s497 = sshll.u32 %s462, 4
          %s498 = int_to_ptr.vmem [resolvable:$true] %s497
          %s499 = sshll.u32 %s496, 4
          %s500 = int_to_ptr.hbm [resolvable:$true] %s499
          %505 = dma.vmem_to_hbm [thread:$0]  %s498, 128, %s500, %s459, 64, 64, 4
        $region60: #{tpu_custom_call.1} parent=35 // pred_fallthru
          _
        // Predicated region
        $region61: #{tpu_custom_call.1} parent=35 // pred_check
          %p506 = pneg %p208
        $region62: #{tpu_custom_call.1} parent=35 // pred_check_branch
          %508 = sbr.rel (%p506) target = $region64
        $region63: #{tpu_custom_call.1} parent=35 // pred_region
          %s509 = smul.u32 2, %s34
          %511 = vsyncadd %s464, 0
          %s512 = smul.addr %s33, 2
          %s513 = sadd.s32 %s509, %s512
          %s514 = smul.addr %s513, 4
          %s515 = scalar_lea.hbm %s6, %s514
          %s516 = sshll.u32 %s467, 4
          %s517 = int_to_ptr.vmem [resolvable:$true] %s516
          %s518 = sshll.u32 %s515, 4
          %s519 = int_to_ptr.hbm [resolvable:$true] %s518
          %524 = dma.vmem_to_hbm [thread:$0]  %s517, 128, %s519, %s464, 64, 64, 4
        $region64: #{tpu_custom_call.1} parent=35 // pred_fallthru
          _
      $region36: #{tpu_custom_call.1} parent=5 // pred_fallthru
        _
      %p525 = scmp.le.s32.totalorder 2, %s24
      // Predicated region
      $region65: #{tpu_custom_call.1} parent=5 // pred_check
        %p526 = pneg %p525
      $region66: #{tpu_custom_call.1} parent=5 // pred_check_branch
        %528 = sbr.rel (%p526) target = $region68
      $region67: #{tpu_custom_call.1} parent=5 // pred_region
        %s529 = ssub.s32 %s24, 2
        // Predicated region
        $region69: #{tpu_custom_call.1} parent=67 // pred_check
          %p530 = pneg %p158
        $region70: #{tpu_custom_call.1} parent=67 // pred_check_branch
          %532 = sbr.rel (%p530) target = $region72
        $region71: #{tpu_custom_call.1} parent=67 // pred_region
          %s533 = sand.u32 %s143, 1
          %s534 = scalar_lea.sflag [#allocation4], %s533
          %s535 = sand.u32 %s143, 1
          %s536 = smul.addr %s535, 8
          %s537 = scalar_lea.vmem [#allocation10], %s536
          %539 = dma.done %s534, 128
        $region72: #{tpu_custom_call.1} parent=67 // pred_fallthru
          _
        // Predicated region
        $region73: #{tpu_custom_call.1} parent=67 // pred_check
          %p540 = pneg %p186
        $region74: #{tpu_custom_call.1} parent=67 // pred_check_branch
          %542 = sbr.rel (%p540) target = $region76
        $region75: #{tpu_custom_call.1} parent=67 // pred_region
          %s543 = sand.u32 %s30, 1
          %s544 = scalar_lea.sflag [#allocation12], %s543
          %s545 = sand.u32 %s171, 1
          %s546 = smul.addr %s545, 8
          %s547 = scalar_lea.vmem [#allocation11], %s546
          %549 = dma.done %s544, 128
        $region76: #{tpu_custom_call.1} parent=67 // pred_fallthru
          _
        // Predicated region
        $region77: #{tpu_custom_call.1} parent=67 // pred_check
          %p550 = pneg %p214
        $region78: #{tpu_custom_call.1} parent=67 // pred_check_branch
          %552 = sbr.rel (%p550) target = $region80
        $region79: #{tpu_custom_call.1} parent=67 // pred_region
          %s553 = sand.u32 %s30, 1
          %s554 = scalar_lea.sflag [#allocation12], %s553
          %s555 = sand.u32 %s199, 1
          %s556 = smul.addr %s555, 8
          %s557 = scalar_lea.vmem [#allocation13], %s556
          %559 = dma.done %s554, 128
        $region80: #{tpu_custom_call.1} parent=67 // pred_fallthru
          _
      $region68: #{tpu_custom_call.1} parent=5 // pred_fallthru
        _
    $region6: #{tpu_custom_call.1} parent=1 // loop_footer
      %s28 = sadd.s32 1, %s24
    $region7: #{tpu_custom_call.1} parent=1 // loop_footer_branch
      %23 = sbr.rel target = $region3
    $region8: #{tpu_custom_call.1} parent=1 // loop_exit
      _
    %560 = vsyncpa [#allocation3], 1
    %s561 = scalar_lea.sflag [#allocation3], 1
    %562 = vsyncpa %s561, 1
    %563 = vsyncpa [#allocation6], 1
    %564 = vsyncpa [#allocation9], 1
    %565 = vsyncpa [#allocation4], 1
    %s566 = scalar_lea.sflag [#allocation4], 1
    %567 = vsyncpa %s566, 1
    %568 = vsyncpa [#allocation12], 1
    %s569 = scalar_lea.sflag [#allocation12], 1
    %570 = vsyncpa %s569, 1

</llo_original>
